<compile_context>
chip_gen: v5e
topology: v5e:2x2
jax: 0.10.0
libtpu: 0.0.40
codegen_flags: <defaults>
</compile_context>

<pallas_src>
import functools

import jax
import jax.numpy as jnp
from jax.experimental import pallas as pl
from jax.experimental.pallas import tpu as pltpu


def _round_up(x, m):
    return ((x + m - 1) // m) * m


def _pick_tile(hw, cap=2048):
    """Largest spatial tile: full HW if it fits, else biggest 128-multiple divisor <= cap."""
    if hw <= cap:
        return hw
    for t in range(cap, 127, -128):
        if hw % t == 0:
            return t
    return 128 if hw % 128 == 0 else hw


# ----------------------------------------------------------------------------
# Kernel 1 (one-off, batch-invariant): adj normalization + GCN1 + LeakyReLU + GCN2
# ----------------------------------------------------------------------------
def _gcn_precompute_kernel(a_ref, inp_ref, w1_ref, w2_ref, x2_ref):
    """a_ref: (C, C) CorrelationMatrix, inp_ref: (C, in_ch),
       w1: (in_ch, G), w2: (G, G), x2_ref out: (C, G)."""
    A = a_ref[...]                                   # (C, C)
    At = jnp.transpose(A)                            # (C, C)
    # gen_adj (ML-GCN): d = rowsum(A)^-1/2 ; adj = D A^T D.
    # eps guards zero row sums.
    d = jax.lax.rsqrt(jnp.sum(A, axis=1, keepdims=True) + 1e-12)   # (C, 1)

    def apply_adj(m):
        # (D A^T D) @ m == d * (A^T @ (d * m)) -- single reduction, MXU matmul.
        return d * jnp.dot(At, d * m, preferred_element_type=jnp.float32)

    s1 = jnp.dot(inp_ref[...], w1_ref[...], preferred_element_type=jnp.float32)
    x1 = apply_adj(s1)
    x1 = jnp.where(x1 > 0, x1, 0.01 * x1)            # nn.LeakyReLU() default slope
    s2 = jnp.dot(x1, w2_ref[...], preferred_element_type=jnp.float32)
    x2_ref[...] = apply_adj(s2)                       # (C, G)


def gcn_precompute(corr, inp0, w1, w2):
    C = corr.shape[0]
    G = w2.shape[1]
    vmem = pl.BlockSpec(memory_space=pltpu.MemorySpace.VMEM)
    return pl.pallas_call(
        _gcn_precompute_kernel,
        out_shape=jax.ShapeDtypeStruct((C, G), jnp.float32),
        in_specs=[vmem, vmem, vmem, vmem],
        out_specs=vmem,
    )(corr, inp0, w1, w2)


# ----------------------------------------------------------------------------
# Kernel 2 (per-batch, fused): backbone stand-in + global avg pool + classifier + sigmoid
# ----------------------------------------------------------------------------
def _feat_pool_classify_kernel(x_ref, wT_ref, b_ref, x2t_ref, o_ref, acc_ref, *, inv_hw):
    """x_ref: (1, Cin, tile) bf16 (HW on lanes), wT_ref: (FP, Cin) bf16,
       b_ref: (FP, 1) f32, x2t_ref: (FP, CP) f32, o_ref: (1, 1, CP) f32,
       acc_ref: (FP, 1) f32 scratch (pooled-feature accumulator)."""
    s = pl.program_id(1)

    @pl.when(s == 0)
    def _():
        acc_ref[...] = jnp.zeros_like(acc_ref)

    x = x_ref[0]                                                        # (Cin, tile) bf16
    y = jnp.dot(wT_ref[...], x, preferred_element_type=jnp.float32)    # (FP, tile) f32, MXU
    y = jnp.maximum(y + b_ref[...], 0.0)                                # bias + ReLU in f32
    acc_ref[...] += jnp.sum(y, axis=1, keepdims=True)                   # lane reduce -> (FP, 1)

    @pl.when(s == pl.num_programs(1) - 1)
    def _():
        feat = acc_ref[...] * inv_hw                                    # (FP, 1)  avg pool
        # logits[b, :] = feat . x2 ; padded rows/cols of x2t are zero.
        logits = jnp.sum(feat * x2t_ref[...], axis=0, keepdims=True)    # (1, CP)
        o_ref[0] = jax.nn.sigmoid(logits)


def fused_forward(x_nchw, conv_w, conv_b, x2, *, tile_cap=2048):
    """conv_w: (F, Cin) [PyTorch Cout,Cin], conv_b: (F,), x2: (C, F). Returns (B, C)."""
    B, Cin, H, W = x_nchw.shape
    HW = H * W
    F = conv_w.shape[0]
    C = x2.shape[0]
    assert x2.shape[1] == F, "backbone feature dim must equal gcn output dim"

    FP = _round_up(F, 8)            # sublane-aligned feature dim
    CP = _round_up(C, 128)          # lane-dense classifier output
    tile = _pick_tile(HW, tile_cap)
    n_tiles = HW // tile

    # (B, Cin, H, W) -> (B, Cin, HW): free reshape, HW lands on lanes. bf16 stream.
    x = x_nchw.reshape(B, Cin, HW).astype(jnp.bfloat16)
    wT = jnp.zeros((FP, Cin), jnp.bfloat16).at[:F, :].set(conv_w.astype(jnp.bfloat16))
    bias = jnp.zeros((FP, 1), jnp.float32).at[:F, 0].set(conv_b.astype(jnp.float32))
    x2t = jnp.zeros((FP, CP), jnp.float32).at[:F, :C].set(
        jnp.transpose(x2).astype(jnp.float32))

    out = pl.pallas_call(
        functools.partial(_feat_pool_classify_kernel, inv_hw=1.0 / HW),
        out_shape=jax.ShapeDtypeStruct((B, 1, CP), jnp.float32),
        grid_spec=pltpu.PrefetchScalarGridSpec(
            num_scalar_prefetch=0,
            grid=(B, n_tiles),
            in_specs=[
                pl.BlockSpec((1, Cin, tile), lambda b, s: (b, 0, s)),
                pl.BlockSpec((FP, Cin), lambda b, s: (0, 0)),   # resident weights
                pl.BlockSpec((FP, 1), lambda b, s: (0, 0)),     # resident bias
                pl.BlockSpec((FP, CP), lambda b, s: (0, 0)),    # resident classifier
            ],
            out_specs=pl.BlockSpec((1, 1, CP), lambda b, s: (b, 0, 0)),
            scratch_shapes=[pltpu.VMEM((FP, 1), jnp.float32)],
        ),
        compiler_params=pltpu.CompilerParams(
            dimension_semantics=("parallel", "arbitrary")),
    )(x, wT, bias, x2t)
    return out.reshape(B, CP)[:, :C]


# ----------------------------------------------------------------------------
# Full forward
# ----------------------------------------------------------------------------
@jax.jit
def shufflenet_v2_add_gcn_forward(x_nchw, inp, params):
    inp0 = inp[0]                                            # inp = inp[0]
    # Batch-invariant GCN head, hoisted out of the per-sample path (one-off kernel).
    x2 = gcn_precompute(params["corr"], inp0, params["w1"], params["w2"])
    return fused_forward(x_nchw, params["conv_w"], params["conv_b"], x2)


# ----------------------------------------------------------------------------
# Plain-JAX reference (for numerical validation)
# ----------------------------------------------------------------------------
def reference_forward(x_nchw, inp, params):
    y = jnp.einsum("bchw,fc->bfhw", x_nchw, params["conv_w"])
    y = jnp.maximum(y + params["conv_b"][None, :, None, None], 0.0)
    feat = jnp.mean(y, axis=(2, 3))                          # (B, F)
    inp0 = inp[0]
    A = params["corr"]
    d = 1.0 / jnp.sqrt(A.sum(1) + 1e-12)
    adj = jnp.transpose(A) * d[:, None] * d[None, :]         # D A^T D
    x1 = adj @ (inp0 @ params["w1"])
    x1 = jnp.where(x1 > 0, x1, 0.01 * x1)
    x2 = adj @ (x1 @ params["w2"])
    return jax.nn.sigmoid(feat @ x2.T)


# ----------------------------------------------------------------------------
# Deterministic parameter construction
# ----------------------------------------------------------------------------
def make_params(key, *, c_in, feat_dim, in_channel, num_classes):
    gcn_dim = feat_dim
    k_conv, k_w1, k_w2 = jax.random.split(key, 3)
    conv_w = jax.random.normal(k_conv, (feat_dim, c_in), jnp.float32) * 0.1
    conv_b = jnp.full((feat_dim,), 0.01, jnp.float32)
    # GCN weights: uniform(-1/sqrt(out), 1/sqrt(out)) as in ML-GCN GraphConvolution
    stdv = 1.0 / (gcn_dim ** 0.5)
    w1 = jax.random.uniform(k_w1, (in_channel, gcn_dim), jnp.float32, -stdv, stdv)
    w2 = jax.random.uniform(k_w2, (gcn_dim, gcn_dim), jnp.float32, -stdv, stdv)
    # TODO(synk): Generate_StatisticalCorrelationMatrix reads an adj_file; stand-in is a
    # deterministic positive symmetric matrix (positive row sums for the rsqrt).
    idx = jnp.arange(num_classes, dtype=jnp.float32)
    corr = 1.0 / (1.0 + jnp.abs(idx[:, None] - idx[None, :]))
    return {"conv_w": conv_w, "conv_b": conv_b, "w1": w1, "w2": w2, "corr": corr}


if __name__ == "__main__":
    B, Cin, H, W = 2, 4, 16, 16     # feature input (NCHW, like PyTorch)
    num_classes = 8                 # scaled-down num_classes (orig e.g. 80)
    in_channel = 32                 # scaled-down word-embedding dim (orig 300)
    gcn_dim = 128                   # scaled-down GCN hidden / backbone feat dim (orig 512)

    key = jax.random.PRNGKey(0)
    k_x, k_inp, k_p = jax.random.split(key, 3)
    x = jax.random.normal(k_x, (B, Cin, H, W), jnp.float32)
    inp = jax.random.normal(k_inp, (B, num_classes, in_channel), jnp.float32)

    params = make_params(k_p, c_in=Cin, feat_dim=gcn_dim,
                         in_channel=in_channel, num_classes=num_classes)

    out = shufflenet_v2_add_gcn_forward(x, inp, params)
    out = jax.block_until_ready(out)

    assert out.shape == (B, num_classes), out.shape
    assert bool(jnp.all((out >= 0.0) & (out <= 1.0)))        # sigmoid output range

    ref = reference_forward(x, inp, params)
    max_err = float(jnp.max(jnp.abs(out - ref)))
    assert max_err < 5e-2, f"max abs err vs reference: {max_err}"

    print("KERNEL_OK")
</pallas_src>

<mosaic_0001>
module attributes {stable_mosaic.version = 11 : i64} {
  func.func @_gcn_precompute_kernel(%arg0: memref<8x8xf32, #tpu.memory_space<vmem>>, %arg1: memref<8x32xf32, #tpu.memory_space<vmem>>, %arg2: memref<32x128xf32, #tpu.memory_space<vmem>>, %arg3: memref<128x128xf32, #tpu.memory_space<vmem>>, %arg4: memref<8x128xf32, #tpu.memory_space<vmem>>) attributes {dimension_semantics = [], scalar_prefetch = 0 : i64, scratch_operands = 0 : i64, tpu.core_type = #tpu.core_type<tc>} {
    %c0 = arith.constant 0 : index
    %c0_0 = arith.constant 0 : index
    %0 = vector.load %arg0[%c0, %c0_0] : memref<8x8xf32, #tpu.memory_space<vmem>>, vector<8x8xf32>
    %1 = tpu.transpose %0, [1, 0] : vector<8x8xf32> -> vector<8x8xf32>
    %cst = arith.constant dense<0.000000e+00> : vector<8xf32>
    %2 = vector.multi_reduction <add>, %0, %cst [1] : vector<8x8xf32> to vector<8xf32>
    %3 = vector.shape_cast %2 : vector<8xf32> to vector<8x1xf32>
    %cst_1 = arith.constant 9.99999996E-13 : f32
    %4 = vector.broadcast %cst_1 : f32 to vector<8x1xf32>
    %5 = arith.addf %3, %4 : vector<8x1xf32>
    %6 = math.rsqrt %5 : vector<8x1xf32>
    %c0_2 = arith.constant 0 : index
    %c0_3 = arith.constant 0 : index
    %7 = vector.load %arg1[%c0_2, %c0_3] : memref<8x32xf32, #tpu.memory_space<vmem>>, vector<8x32xf32>
    %c0_4 = arith.constant 0 : index
    %c0_5 = arith.constant 0 : index
    %8 = vector.load %arg2[%c0_4, %c0_5] : memref<32x128xf32, #tpu.memory_space<vmem>>, vector<32x128xf32>
    %cst_6 = arith.constant dense<0.000000e+00> : vector<8x128xf32>
    %9 = tpu.matmul %7, %8, %cst_6 {dimension_numbers = #tpu.dot_dimension_numbers<[1], [0], [0], [1], [0, 0, 1, 1], [], []>} : vector<8x32xf32>, vector<32x128xf32>, vector<8x128xf32> -> vector<8x128xf32>
    %10 = vector.broadcast %6 : vector<8x1xf32> to vector<8x128xf32>
    %11 = arith.mulf %10, %9 : vector<8x128xf32>
    %cst_7 = arith.constant dense<0.000000e+00> : vector<8x128xf32>
    %12 = tpu.matmul %1, %11, %cst_7 {dimension_numbers = #tpu.dot_dimension_numbers<[1], [0], [0], [1], [0, 0, 1, 1], [], []>} : vector<8x8xf32>, vector<8x128xf32>, vector<8x128xf32> -> vector<8x128xf32>
    %13 = vector.broadcast %6 : vector<8x1xf32> to vector<8x128xf32>
    %14 = arith.mulf %13, %12 : vector<8x128xf32>
    %cst_8 = arith.constant 0.000000e+00 : f32
    %15 = vector.broadcast %cst_8 : f32 to vector<8x128xf32>
    %16 = arith.cmpf ogt, %14, %15 : vector<8x128xf32>
    %cst_9 = arith.constant 0.00999999977 : f32
    %17 = vector.broadcast %cst_9 : f32 to vector<8x128xf32>
    %18 = arith.mulf %17, %14 : vector<8x128xf32>
    %19 = arith.select %16, %14, %18 : vector<8x128xi1>, vector<8x128xf32>
    %c0_10 = arith.constant 0 : index
    %c0_11 = arith.constant 0 : index
    %20 = vector.load %arg3[%c0_10, %c0_11] : memref<128x128xf32, #tpu.memory_space<vmem>>, vector<128x128xf32>
    %cst_12 = arith.constant dense<0.000000e+00> : vector<8x128xf32>
    %21 = tpu.matmul %19, %20, %cst_12 {dimension_numbers = #tpu.dot_dimension_numbers<[1], [0], [0], [1], [0, 0, 1, 1], [], []>} : vector<8x128xf32>, vector<128x128xf32>, vector<8x128xf32> -> vector<8x128xf32>
    %22 = vector.broadcast %6 : vector<8x1xf32> to vector<8x128xf32>
    %23 = arith.mulf %22, %21 : vector<8x128xf32>
    %cst_13 = arith.constant dense<0.000000e+00> : vector<8x128xf32>
    %24 = tpu.matmul %1, %23, %cst_13 {dimension_numbers = #tpu.dot_dimension_numbers<[1], [0], [0], [1], [0, 0, 1, 1], [], []>} : vector<8x8xf32>, vector<8x128xf32>, vector<8x128xf32> -> vector<8x128xf32>
    %25 = vector.broadcast %6 : vector<8x1xf32> to vector<8x128xf32>
    %26 = arith.mulf %25, %24 : vector<8x128xf32>
    %c0_14 = arith.constant 0 : index
    %c0_15 = arith.constant 0 : index
    %27 = vector.load %arg4[%c0_14, %c0_15] : memref<8x128xf32, #tpu.memory_space<vmem>>, vector<8x128xf32>
    tpu.vector_store %arg4[%c0_14, %c0_15], %26 {strides = array<i32>} : memref<8x128xf32, #tpu.memory_space<vmem>>, vector<8x128xf32>,
    return
  }
}

module attributes {stable_mosaic.version = 11 : i64} {
  func.func @_feat_pool_classify_kernel(%arg0: i32, %arg1: i32, %arg2: memref<1x4x256xbf16, #tpu.memory_space<vmem>>, %arg3: memref<128x4xbf16, #tpu.memory_space<vmem>>, %arg4: memref<128x1xf32, #tpu.memory_space<vmem>>, %arg5: memref<128x128xf32, #tpu.memory_space<vmem>>, %arg6: memref<1x1x128xf32, #tpu.memory_space<vmem>>, %arg7: memref<128x1xf32, #tpu.memory_space<vmem>>) attributes {dimension_semantics = [#tpu.dimension_semantics<parallel>, #tpu.dimension_semantics<arbitrary>], iteration_bounds = array<i64: 2, 1>, scalar_prefetch = 0 : i64, scratch_operands = 1 : i64, tpu.core_type = #tpu.core_type<tc>, window_params = [{transform_indices = @transform_0, window_bounds = array<i64: 1, 4, 256>}, {pipeline_mode = #tpu.pipeline_mode<synchronous>, transform_indices = @transform_1, window_bounds = array<i64: 128, 4>}, {pipeline_mode = #tpu.pipeline_mode<synchronous>, transform_indices = @transform_2, window_bounds = array<i64: 128, 1>}, {pipeline_mode = #tpu.pipeline_mode<synchronous>, transform_indices = @transform_3, window_bounds = array<i64: 128, 128>}, {transform_indices = @transform_4, window_bounds = array<i64: 1, 1, 128>}]} {
    %c0_i32 = arith.constant 0 : i32
    %0 = arith.cmpi eq, %arg1, %c0_i32 : i32
    %1 = arith.extui %0 : i1 to i32
    %c0_i32_0 = arith.constant 0 : i32
    %2 = arith.cmpi ne, %1, %c0_i32_0 : i32
    scf.if %2 {
      %cst_15 = arith.constant 0.000000e+00 : f32
      %20 = vector.broadcast %cst_15 : f32 to vector<128x1xf32>
      %c0_16 = arith.constant 0 : index
      %c0_17 = arith.constant 0 : index
      %21 = vector.load %arg7[%c0_16, %c0_17] : memref<128x1xf32, #tpu.memory_space<vmem>>, vector<128x1xf32>
      tpu.vector_store %arg7[%c0_16, %c0_17], %20 {strides = array<i32>} : memref<128x1xf32, #tpu.memory_space<vmem>>, vector<128x1xf32>,
    } else {
    }
    %c0 = arith.constant 0 : index
    %c0_1 = arith.constant 0 : index
    %c0_2 = arith.constant 0 : index
    %3 = vector.load %arg2[%c0, %c0_1, %c0_2] : memref<1x4x256xbf16, #tpu.memory_space<vmem>>, vector<1x4x256xbf16>
    %4 = vector.shape_cast %3 : vector<1x4x256xbf16> to vector<4x256xbf16>
    %c0_3 = arith.constant 0 : index
    %c0_4 = arith.constant 0 : index
    %5 = vector.load %arg3[%c0_3, %c0_4] : memref<128x4xbf16, #tpu.memory_space<vmem>>, vector<128x4xbf16>
    %cst = arith.constant dense<0.000000e+00> : vector<128x256xf32>
    %6 = tpu.matmul %5, %4, %cst {dimension_numbers = #tpu.dot_dimension_numbers<[1], [0], [0], [1], [0, 0, 1, 1], [], []>} : vector<128x4xbf16>, vector<4x256xbf16>, vector<128x256xf32> -> vector<128x256xf32>
    %c0_5 = arith.constant 0 : index
    %c0_6 = arith.constant 0 : index
    %7 = vector.load %arg4[%c0_5, %c0_6] : memref<128x1xf32, #tpu.memory_space<vmem>>, vector<128x1xf32>
    %8 = vector.broadcast %7 : vector<128x1xf32> to vector<128x256xf32>
    %9 = arith.addf %6, %8 : vector<128x256xf32>
    %cst_7 = arith.constant 0.000000e+00 : f32
    %10 = vector.broadcast %cst_7 : f32 to vector<128x256xf32>
    %11 = arith.maximumf %9, %10 : vector<128x256xf32>
    %c0_8 = arith.constant 0 : index
    %c0_9 = arith.constant 0 : index
    %12 = vector.load %arg7[%c0_8, %c0_9] : memref<128x1xf32, #tpu.memory_space<vmem>>, vector<128x1xf32>
    %cst_10 = arith.constant dense<0.000000e+00> : vector<128xf32>
    %13 = vector.multi_reduction <add>, %11, %cst_10 [1] : vector<128x256xf32> to vector<128xf32>
    %14 = vector.shape_cast %13 : vector<128xf32> to vector<128x1xf32>
    %15 = arith.addf %12, %14 : vector<128x1xf32>
    %c0_11 = arith.constant 0 : index
    %c0_12 = arith.constant 0 : index
    %16 = vector.load %arg7[%c0_11, %c0_12] : memref<128x1xf32, #tpu.memory_space<vmem>>, vector<128x1xf32>
    tpu.vector_store %arg7[%c0_11, %c0_12], %15 {strides = array<i32>} : memref<128x1xf32, #tpu.memory_space<vmem>>, vector<128x1xf32>,
    %c0_i32_13 = arith.constant 0 : i32
    %17 = arith.cmpi eq, %arg1, %c0_i32_13 : i32
    %18 = arith.extui %17 : i1 to i32
    %c0_i32_14 = arith.constant 0 : i32
    %19 = arith.cmpi ne, %18, %c0_i32_14 : i32
    scf.if %19 {
      %c0_15 = arith.constant 0 : index
      %c0_16 = arith.constant 0 : index
      %20 = vector.load %arg7[%c0_15, %c0_16] : memref<128x1xf32, #tpu.memory_space<vmem>>, vector<128x1xf32>
      %cst_17 = arith.constant 3.906250e-03 : f32
      %21 = vector.broadcast %cst_17 : f32 to vector<128x1xf32>
      %22 = arith.mulf %20, %21 : vector<128x1xf32>
      %c0_18 = arith.constant 0 : index
      %c0_19 = arith.constant 0 : index
      %23 = vector.load %arg5[%c0_18, %c0_19] : memref<128x128xf32, #tpu.memory_space<vmem>>, vector<128x128xf32>
      %24 = vector.broadcast %22 : vector<128x1xf32> to vector<128x128xf32>
      %25 = arith.mulf %24, %23 : vector<128x128xf32>
      %cst_20 = arith.constant dense<0.000000e+00> : vector<128xf32>
      %26 = vector.multi_reduction <add>, %25, %cst_20 [0] : vector<128x128xf32> to vector<128xf32>
      %27 = vector.shape_cast %26 : vector<128xf32> to vector<1x128xf32>
      %28 = arith.negf %27 : vector<1x128xf32>
      %29 = math.exp %28 : vector<1x128xf32>
      %cst_21 = arith.constant 1.000000e+00 : f32
      %30 = vector.broadcast %cst_21 : f32 to vector<1x128xf32>
      %31 = arith.addf %30, %29 : vector<1x128xf32>
      %32 = arith.divf %30, %31 : vector<1x128xf32>
      %c0_22 = arith.constant 0 : index
      %c0_23 = arith.constant 0 : index
      %c0_24 = arith.constant 0 : index
      %33 = vector.load %arg6[%c0_22, %c0_23, %c0_24] : memref<1x1x128xf32, #tpu.memory_space<vmem>>, vector<1x1x128xf32>
      %34 = vector.shape_cast %33 : vector<1x1x128xf32> to vector<1x128xf32>
      %35 = vector.shape_cast %32 : vector<1x128xf32> to vector<1x1x128xf32>
      tpu.vector_store %arg6[%c0_22, %c0_23, %c0_24], %35 {strides = array<i32>} : memref<1x1x128xf32, #tpu.memory_space<vmem>>, vector<1x1x128xf32>,
    } else {
    }
    return
  }
  func.func @transform_0(%arg0: i32, %arg1: i32) -> (i32, i32, i32) {
    %c0_i32 = arith.constant 0 : i32
    %c0_i32_0 = arith.constant 0 : i32
    return %arg0, %c0_i32, %arg1 : i32, i32, i32
  }
  func.func @transform_1(%arg0: i32, %arg1: i32) -> (i32, i32) {
    %c0_i32 = arith.constant 0 : i32
    %c0_i32_0 = arith.constant 0 : i32
    %c0_i32_1 = arith.constant 0 : i32
    return %c0_i32, %c0_i32_0 : i32, i32
  }
  func.func @transform_2(%arg0: i32, %arg1: i32) -> (i32, i32) {
    %c0_i32 = arith.constant 0 : i32
    %c0_i32_0 = arith.constant 0 : i32
    %c0_i32_1 = arith.constant 0 : i32
    return %c0_i32, %c0_i32_0 : i32, i32
  }
  func.func @transform_3(%arg0: i32, %arg1: i32) -> (i32, i32) {
    %c0_i32 = arith.constant 0 : i32
    %c0_i32_0 = arith.constant 0 : i32
    %c0_i32_1 = arith.constant 0 : i32
    return %c0_i32, %c0_i32_0 : i32, i32
  }
  func.func @transform_4(%arg0: i32, %arg1: i32) -> (i32, i32, i32) {
    %c0_i32 = arith.constant 0 : i32
    %c0_i32_0 = arith.constant 0 : i32
    %c0_i32_1 = arith.constant 0 : i32
    return %arg0, %c0_i32, %c0_i32_0 : i32, i32, i32
  }
}

</mosaic_0001>

<llo_original>
// kernel: shufflenet_v2_add_gcn_forward.2
$region0: #{shufflenet_v2_add_gcn_forward.2}
  #allocation0 [shape = 'u32[]', space=smem, size = 0x4, offset = 0x4, fixed_abs, tag = 'smem constant byte address 0x4 - core index']
  #allocation1 [shape = 'u32[72,128]{1,0:T(1,128)}', space=vmem, size = 0x9000, scoped, tag = 'internal scratch']
  %s0 = inlined_call_operand.vmem [shape: f32[8,8], index: 0, kind: input, shape index: {}]
  %s1 = inlined_call_operand.vmem [shape: f32[8,32], index: 1, kind: input, shape index: {}]
  %s2 = inlined_call_operand.hbm [shape: f32[32,128], index: 2, kind: input, shape index: {}]
  %s3 = inlined_call_operand.hbm [shape: f32[128,128], index: 3, kind: input, shape index: {}]
  %s4 = inlined_call_operand.vmem [shape: f32[8,128], index: 4, kind: output, shape index: {}]
  %s5 = sld [smem:[#allocation0]]
  $region34: #{shufflenet_v2_add_gcn_forward.2} parent=0
    _
  %s7 = ssub.s32 1, %s5
  %s8 = scalar_select 0, %s7, %s5
  $region1: #{shufflenet_v2_add_gcn_forward.2} parent=0
    #allocation2 [shape = 'u8[16384]{0}', space=vmem, size = 0x4000, scoped, tag = 'input window, operand 2, single buffered']
    #allocation3 [shape = 's32[1]{0}', space=sflag, size = 0x4, scoped, tag = 'scoped memory for shufflenet_v2_add_gcn_forward.2']
    #allocation4 [shape = 'u8[65536]{0}', space=vmem, size = 0x10000, scoped, tag = 'input window, operand 3, single buffered']
    #allocation5 [shape = 's32[1]{0}', space=sflag, size = 0x4, scoped, tag = 'scoped memory for shufflenet_v2_add_gcn_forward.2']
    %9 = vsyncpa [#allocation3], 0
    %10 = vsyncpa [#allocation5], 0
    // Predicated region
    $region2: #{shufflenet_v2_add_gcn_forward.2} parent=1 // pred_check
      _
    $region3: #{shufflenet_v2_add_gcn_forward.2} parent=1 // pred_check_branch
      %12 = sbr.rel (0) target = $region5
    $region4: #{shufflenet_v2_add_gcn_forward.2} parent=1 // pred_region
      _
    $region5: #{shufflenet_v2_add_gcn_forward.2} parent=1 // pred_fallthru
      _
    // Predicated region
    $region6: #{shufflenet_v2_add_gcn_forward.2} parent=1 // pred_check
      _
    $region7: #{shufflenet_v2_add_gcn_forward.2} parent=1 // pred_check_branch
      %14 = sbr.rel (0) target = $region9
    $region8: #{shufflenet_v2_add_gcn_forward.2} parent=1 // pred_region
      _
    $region9: #{shufflenet_v2_add_gcn_forward.2} parent=1 // pred_fallthru
      _
    // Predicated region
    $region10: #{shufflenet_v2_add_gcn_forward.2} parent=1 // pred_check
      _
    $region11: #{shufflenet_v2_add_gcn_forward.2} parent=1 // pred_check_branch
      %16 = sbr.rel (0) target = $region13
    $region12: #{shufflenet_v2_add_gcn_forward.2} parent=1 // pred_region
      %18 = vsyncadd [#allocation3], 0
      %s19 = sshll.u32 %s2, 4
      %s20 = int_to_ptr.hbm [resolvable:$true] %s19
      %s21 = sshll.u32 [#allocation2], 4
      %s22 = int_to_ptr.vmem [resolvable:$true] %s21
      %27 = dma.hbm_to_vmem [thread:$0]  %s20, 512, %s22, [#allocation3], 128, 128, 8
    $region13: #{shufflenet_v2_add_gcn_forward.2} parent=1 // pred_fallthru
      _
    // Predicated region
    $region14: #{shufflenet_v2_add_gcn_forward.2} parent=1 // pred_check
      _
    $region15: #{shufflenet_v2_add_gcn_forward.2} parent=1 // pred_check_branch
      %29 = sbr.rel (0) target = $region17
    $region16: #{shufflenet_v2_add_gcn_forward.2} parent=1 // pred_region
      %31 = vsyncadd [#allocation5], 0
      %s32 = sshll.u32 %s3, 4
      %s33 = int_to_ptr.hbm [resolvable:$true] %s32
      %s34 = sshll.u32 [#allocation4], 4
      %s35 = int_to_ptr.vmem [resolvable:$true] %s34
      %40 = dma.hbm_to_vmem [thread:$0]  %s33, 2048, %s35, [#allocation5], 128, 128, 8
    $region17: #{shufflenet_v2_add_gcn_forward.2} parent=1 // pred_fallthru
      _
    // Predicated region
    $region18: #{shufflenet_v2_add_gcn_forward.2} parent=1 // pred_check
      _
    $region19: #{shufflenet_v2_add_gcn_forward.2} parent=1 // pred_check_branch
      %42 = sbr.rel (0) target = $region21
    $region20: #{shufflenet_v2_add_gcn_forward.2} parent=1 // pred_region
      %44 = dma.done [#allocation3], 512
    $region21: #{shufflenet_v2_add_gcn_forward.2} parent=1 // pred_fallthru
      _
    // Predicated region
    $region22: #{shufflenet_v2_add_gcn_forward.2} parent=1 // pred_check
      _
    $region23: #{shufflenet_v2_add_gcn_forward.2} parent=1 // pred_check_branch
      %46 = sbr.rel (0) target = $region25
    $region24: #{shufflenet_v2_add_gcn_forward.2} parent=1 // pred_region
      %48 = dma.done [#allocation5], 2048
    $region25: #{shufflenet_v2_add_gcn_forward.2} parent=1 // pred_fallthru
      _
    %v49 = vld [vmem:[%s0] sm:$0xff]
    %50 = vxpose.xlu0.b32.start [1/16] %v49, 128
    %51 = vxpose.xlu0.b32.cont [2/16] 0.0, 128
    %52 = vxpose.xlu0.b32.cont [3/16] 0.0, 128
    %53 = vxpose.xlu0.b32.cont [4/16] 0.0, 128
    %54 = vxpose.xlu0.b32.cont [5/16] 0.0, 128
    %55 = vxpose.xlu0.b32.cont [6/16] 0.0, 128
    %56 = vxpose.xlu0.b32.cont [7/16] 0.0, 128
    %57 = vxpose.xlu0.b32.cont [8/16] 0.0, 128
    %58 = vxpose.xlu0.b32.cont [9/16] 0.0, 128
    %59 = vxpose.xlu0.b32.cont [10/16] 0.0, 128
    %60 = vxpose.xlu0.b32.cont [11/16] 0.0, 128
    %61 = vxpose.xlu0.b32.cont [12/16] 0.0, 128
    %62 = vxpose.xlu0.b32.cont [13/16] 0.0, 128
    %63 = vxpose.xlu0.b32.cont [14/16] 0.0, 128
    %64 = vxpose.xlu0.b32.cont [15/16] 0.0, 128
    %65 = vxpose.xlu0.b32.end [16/16] 0.0, 128
    %v66 = vpop.trf.xlu0
    %v67 = vpop.trf.xlu0
    %v68 = vpop.trf.xlu0
    %v69 = vpop.trf.xlu0
    %v70 = vpop.trf.xlu0
    %v71 = vpop.trf.xlu0
    %v72 = vpop.trf.xlu0
    %v73 = vpop.trf.xlu0
    %v74 = vpop.trf.xlu0
    %v75 = vpop.trf.xlu0
    %v76 = vpop.trf.xlu0
    %v77 = vpop.trf.xlu0
    %v78 = vpop.trf.xlu0
    %v79 = vpop.trf.xlu0
    %v80 = vpop.trf.xlu0
    %v81 = vpop.trf.xlu0
    %vm82 = vcmask 64512
    %v83 = vsel %vm82, %v49, 0.0
    %84 = vadd.xlane.f32.xlu0 %v83
    %v85 = vpop.xlane.xlu0 %84
    %v86 = vadd.f32 %v85, 1e-12
    %v87 = vrsqrt.pop %v86
    %v88 = vmul.f32 %v87, %v86
    %v89 = vmul.f32 %v88, %v87
    %v90 = vmul.f32 0.5, %v89
    %v91 = vsub.f32 1.5, %v90
    %v92 = vmul.f32 %v87, %v91
    %vm93 = vweird.f32 %v86
    %vm94 = vweird.f32 %v87
    %vm95 = vmor %vm93, %vm94
    %v96 = vsel %vm95, %v87, %v92
    %v97 = vld [vmem:[%s1] sm:$0xff]
    %v98 = vld [vmem:[#allocation2] sm:$0xff]
    %v99 = vld [vmem:[#allocation2 + $0x8] sm:$0xff]
    %v100 = vld [vmem:[#allocation2 + $0x10] sm:$0xff]
    %v101 = vld [vmem:[#allocation2 + $0x18] sm:$0xff]
    %vm102 = vcmask 261120
    %v104 = vsel %vm102, %v97, 0
    %106 = vmatpush.msra.mxu0 0.0
    %107 = vmatpush.msra.mxu0 0.0
    %108 = vmatpush.msra.mxu0 0.0
    %109 = vmatpush.msra.mxu0 0.0
    %110 = vmatpush.msra.mxu0 0.0
    %111 = vmatpush.msra.mxu0 0.0
    %112 = vmatpush.msra.mxu0 0.0
    %113 = vmatpush.msra.mxu0 0.0
    %114 = vmatpush.msra.mxu0 0.0
    %115 = vmatpush.msra.mxu0 0.0
    %116 = vmatpush.msra.mxu0 0.0
    %117 = vmatpush.msra.mxu0 0.0
    %118 = vmatpush.msra.mxu0 %v101
    %119 = vmatpush.msra.mxu0 %v100
    %120 = vmatpush.msra.mxu0 %v99
    %121 = vmatpush.msra.mxu0 %v98
    %122 = vmatmul.f32.gmra.mxu0 %v104
    %v123 = vpop.f32.mrf.mxu0
    %v124 = vadd.f32 0.0, %v123
    %125 = vdwg.mxu0
    %v126 = vmul.f32 %v96, %v124
    %v128 = vsel %vm82, %v66, 0
    %130 = vmatpush.msra.mxu0 0.0
    %131 = vmatpush.msra.mxu0 0.0
    %132 = vmatpush.msra.mxu0 0.0
    %133 = vmatpush.msra.mxu0 0.0
    %134 = vmatpush.msra.mxu0 0.0
    %135 = vmatpush.msra.mxu0 0.0
    %136 = vmatpush.msra.mxu0 0.0
    %137 = vmatpush.msra.mxu0 0.0
    %138 = vmatpush.msra.mxu0 0.0
    %139 = vmatpush.msra.mxu0 0.0
    %140 = vmatpush.msra.mxu0 0.0
    %141 = vmatpush.msra.mxu0 0.0
    %142 = vmatpush.msra.mxu0 0.0
    %143 = vmatpush.msra.mxu0 0.0
    %144 = vmatpush.msra.mxu0 0.0
    %145 = vmatpush.msra.mxu0 %v126
    %146 = vmatmul.f32.gmra.mxu0 %v128
    %v147 = vpop.f32.mrf.mxu0
    %v148 = vadd.f32 0.0, %v147
    %149 = vdwg.mxu0
    %v150 = vmul.f32 %v96, %v148
    %vm151 = vcmp.gt.f32.partialorder %v150, 0.0
    %v152 = vmul.f32 %v150, 0.01
    %v153 = vsel %vm151, %v150, %v152
    %v154 = vld [vmem:[#allocation4] sm:$0xff]
    %v155 = vld [vmem:[#allocation4 + $0x8] sm:$0xff]
    %v156 = vld [vmem:[#allocation4 + $0x10] sm:$0xff]
    %v157 = vld [vmem:[#allocation4 + $0x18] sm:$0xff]
    %v158 = vld [vmem:[#allocation4 + $0x20] sm:$0xff]
    %v159 = vld [vmem:[#allocation4 + $0x28] sm:$0xff]
    %v160 = vld [vmem:[#allocation4 + $0x30] sm:$0xff]
    %v161 = vld [vmem:[#allocation4 + $0x38] sm:$0xff]
    %v162 = vld [vmem:[#allocation4 + $0x40] sm:$0xff]
    %v163 = vld [vmem:[#allocation4 + $0x48] sm:$0xff]
    %v164 = vld [vmem:[#allocation4 + $0x50] sm:$0xff]
    %v165 = vld [vmem:[#allocation4 + $0x58] sm:$0xff]
    %v166 = vld [vmem:[#allocation4 + $0x60] sm:$0xff]
    %v167 = vld [vmem:[#allocation4 + $0x68] sm:$0xff]
    %v168 = vld [vmem:[#allocation4 + $0x70] sm:$0xff]
    %v169 = vld [vmem:[#allocation4 + $0x78] sm:$0xff]
    %170 = vmatpush.msra.mxu0 %v169
    %171 = vmatpush.msra.mxu0 %v168
    %172 = vmatpush.msra.mxu0 %v167
    %173 = vmatpush.msra.mxu0 %v166
    %174 = vmatpush.msra.mxu0 %v165
    %175 = vmatpush.msra.mxu0 %v164
    %176 = vmatpush.msra.mxu0 %v163
    %177 = vmatpush.msra.mxu0 %v162
    %178 = vmatpush.msra.mxu0 %v161
    %179 = vmatpush.msra.mxu0 %v160
    %180 = vmatpush.msra.mxu0 %v159
    %181 = vmatpush.msra.mxu0 %v158
    %182 = vmatpush.msra.mxu0 %v157
    %183 = vmatpush.msra.mxu0 %v156
    %184 = vmatpush.msra.mxu0 %v155
    %185 = vmatpush.msra.mxu0 %v154
    %186 = vmatmul.f32.gmra.mxu0 %v153
    %v187 = vpop.f32.mrf.mxu0
    %v188 = vadd.f32 0.0, %v187
    %189 = vdwg.mxu0
    %v190 = vmul.f32 %v96, %v188
    %191 = vmatpush.msra.mxu0 0.0
    %192 = vmatpush.msra.mxu0 0.0
    %193 = vmatpush.msra.mxu0 0.0
    %194 = vmatpush.msra.mxu0 0.0
    %195 = vmatpush.msra.mxu0 0.0
    %196 = vmatpush.msra.mxu0 0.0
    %197 = vmatpush.msra.mxu0 0.0
    %198 = vmatpush.msra.mxu0 0.0
    %199 = vmatpush.msra.mxu0 0.0
    %200 = vmatpush.msra.mxu0 0.0
    %201 = vmatpush.msra.mxu0 0.0
    %202 = vmatpush.msra.mxu0 0.0
    %203 = vmatpush.msra.mxu0 0.0
    %204 = vmatpush.msra.mxu0 0.0
    %205 = vmatpush.msra.mxu0 0.0
    %206 = vmatpush.msra.mxu0 %v190
    %207 = vmatmul.f32.gmra.mxu0 %v128
    %v208 = vpop.f32.mrf.mxu0
    %v209 = vadd.f32 0.0, %v208
    %210 = vdwg.mxu0
    %v211 = vmul.f32 %v96, %v209
    %212 = vst [vmem:[%s4] sm:$0xff] %v211
    // Predicated region
    $region26: #{shufflenet_v2_add_gcn_forward.2} parent=1 // pred_check
      _
    $region27: #{shufflenet_v2_add_gcn_forward.2} parent=1 // pred_check_branch
      %214 = sbr.rel (0) target = $region29
    $region28: #{shufflenet_v2_add_gcn_forward.2} parent=1 // pred_region
      _
    $region29: #{shufflenet_v2_add_gcn_forward.2} parent=1 // pred_fallthru
      _
    // Predicated region
    $region30: #{shufflenet_v2_add_gcn_forward.2} parent=1 // pred_check
      _
    $region31: #{shufflenet_v2_add_gcn_forward.2} parent=1 // pred_check_branch
      %216 = sbr.rel (0) target = $region33
    $region32: #{shufflenet_v2_add_gcn_forward.2} parent=1 // pred_region
      _
    $region33: #{shufflenet_v2_add_gcn_forward.2} parent=1 // pred_fallthru
      _
    %217 = vsyncpa [#allocation3], 1
    %218 = vsyncpa [#allocation5], 1

// kernel: shufflenet_v2_add_gcn_forward.3
$region0: #{shufflenet_v2_add_gcn_forward.3}
  #allocation0 [shape = 'u32[]', space=smem, size = 0x4, offset = 0x4, fixed_abs, tag = 'smem constant byte address 0x4 - core index']
  #allocation1 [shape = 'u32[72,128]{1,0:T(1,128)}', space=vmem, size = 0x9000, scoped, tag = 'internal scratch']
  #allocation2 [shape = 'f32[128,1]{1,0:T(8,128)}', space=vmem, size = 0x10000, scoped, tag = 'scratch operand']
  %s0 = inlined_call_operand.vmem [shape: bf16[2,4,256], index: 0, kind: input, shape index: {}]
  %s1 = inlined_call_operand.vmem [shape: bf16[128,4], index: 1, kind: input, shape index: {}]
  %s2 = inlined_call_operand.vmem [shape: f32[128,1], index: 2, kind: input, shape index: {}]
  %s3 = inlined_call_operand.vmem [shape: f32[128,128], index: 3, kind: input, shape index: {}]
  %s4 = inlined_call_operand.hbm [shape: f32[2,1,128], index: 4, kind: output, shape index: {}]
  %s5 = sld [smem:[#allocation0]]
  $region57: #{shufflenet_v2_add_gcn_forward.3} parent=0
    _
  %s7 = ssub.s32 1, %s5
  %s8 = scalar_select 0, %s7, %s5
  $region1: #{shufflenet_v2_add_gcn_forward.3} parent=0
    #allocation3 [shape = 'u8[1024]{0}', space=vmem, size = 0x400, scoped, tag = 'output window, operand 0']
    #allocation4 [shape = 's32[2]{0}', space=sflag, size = 0x8, scoped, tag = 'scoped memory for shufflenet_v2_add_gcn_forward.3']
    %9 = vsyncpa [#allocation4], 0
    %s10 = scalar_lea.sflag [#allocation4], 1
    %11 = vsyncpa %s10, 0
    loop: start=0, step=1, limit=4
    $region2: #{shufflenet_v2_add_gcn_forward.3} parent=1 // loop_pre_header
      _
    $region3: #{shufflenet_v2_add_gcn_forward.3} parent=1 // loop_header
      %s13 = sphi 0, %s17
      %p14 = scmp.ge.s32.totalorder %s13, 4
      %s20 = sphi 0, %s32
      %s21 = sphi 0, %s28
      %s22 = sphi 0, %s20
      %s23 = sphi 0, %s21
      %s24 = sphi 0, %s22
      %s25 = sphi 0, %s23
      %s37 = sphi 0, %s39
      %s40 = sphi 0, %s37
      %s41 = sphi 0, %s40
      %s57 = sphi 0, %s41
      %s61 = sphi 0, %s61
      %s63 = sphi 0, %s61
      %s64 = sphi 0, %s63
      %s78 = sphi 0, %s64
      %s82 = sphi 0, %s82
      %s84 = sphi 0, %s82
      %s85 = sphi 0, %s84
      %s99 = sphi 0, %s85
      %s103 = sphi 0, %s103
      %s105 = sphi 0, %s103
      %s106 = sphi 0, %s105
      %s120 = sphi 0, %s106
      %s126 = sphi 0, %s128
      %s129 = sphi 0, %s126
      %s130 = sphi 0, %s129
      %s146 = sphi 0, %s130
    $region4: #{shufflenet_v2_add_gcn_forward.3} parent=1 // loop_header_branch
      %16 = sbr.rel (%p14) target = $region8
    $region5: #{shufflenet_v2_add_gcn_forward.3} parent=1 // loop_body
      %s18 = ssub.s32 %s13, 1
      %s19 = ssub.s32 %s13, 2
      %s26 = sadd.s32 1, %s21
      %p27 = scmp.ge.s32.totalorder %s26, 1
      %s28 = scalar_select %p27, 0, %s26
      %s29 = sadd.s32 1, %s20
      %s30 = scalar_select %p27, %s29, %s20
      %p31 = scmp.ge.s32.totalorder %s30, 2
      %s32 = scalar_select %p31, 0, %s30
      %s33 = ssub.s32 %s20, %s32
      %s34 = ssub.s32 %s21, %s28
      %s35 = sor.u32 %s33, %s34
      %p36 = scmp.eq.s32.totalorder %s35, 0
      %s38 = sadd.s32 %s37, 1
      %s39 = scalar_select %p36, %s37, %s38
      %p42 = pneg %p36
      %p43 = scmp.eq.s32.totalorder %s13, 1
      %p44 = por %p42, %p43
      %p45 = scmp.ne.s32.totalorder %s37, %s40
      %p46 = scmp.eq.s32.totalorder %s13, 0
      %p47 = por %p45, %p46
      %p48 = scmp.ne.s32.totalorder %s37, %s40
      %p49 = scmp.eq.s32.totalorder %s18, 1
      %p50 = por %p48, %p49
      %p51 = scmp.ne.s32.totalorder %s40, %s41
      %p52 = scmp.eq.s32.totalorder %s18, 0
      %p53 = por %p51, %p52
      %p54 = scmp.ne.s32.totalorder %s40, %s41
      %p55 = scmp.eq.s32.totalorder %s19, 1
      %p56 = por %p54, %p55
      %p58 = scmp.ne.s32.totalorder %s41, %s57
      %p59 = scmp.eq.s32.totalorder %s19, 0
      %p60 = por %p58, %p59
      %s62 = sadd.s32 %s61, 1
      %p65 = scmp.eq.s32.totalorder %s13, 1
      %p66 = scmp.ne.s32.totalorder %s61, %s63
      %p67 = scmp.eq.s32.totalorder %s13, 0
      %p68 = por %p66, %p67
      %p69 = scmp.ne.s32.totalorder %s61, %s63
      %p70 = scmp.eq.s32.totalorder %s18, 1
      %p71 = por %p69, %p70
      %p72 = scmp.ne.s32.totalorder %s63, %s64
      %p73 = scmp.eq.s32.totalorder %s18, 0
      %p74 = por %p72, %p73
      %p75 = scmp.ne.s32.totalorder %s63, %s64
      %p76 = scmp.eq.s32.totalorder %s19, 1
      %p77 = por %p75, %p76
      %p79 = scmp.ne.s32.totalorder %s64, %s78
      %p80 = scmp.eq.s32.totalorder %s19, 0
      %p81 = por %p79, %p80
      %s83 = sadd.s32 %s82, 1
      %p86 = scmp.eq.s32.totalorder %s13, 1
      %p87 = scmp.ne.s32.totalorder %s82, %s84
      %p88 = scmp.eq.s32.totalorder %s13, 0
      %p89 = por %p87, %p88
      %p90 = scmp.ne.s32.totalorder %s82, %s84
      %p91 = scmp.eq.s32.totalorder %s18, 1
      %p92 = por %p90, %p91
      %p93 = scmp.ne.s32.totalorder %s84, %s85
      %p94 = scmp.eq.s32.totalorder %s18, 0
      %p95 = por %p93, %p94
      %p96 = scmp.ne.s32.totalorder %s84, %s85
      %p97 = scmp.eq.s32.totalorder %s19, 1
      %p98 = por %p96, %p97
      %p100 = scmp.ne.s32.totalorder %s85, %s99
      %p101 = scmp.eq.s32.totalorder %s19, 0
      %p102 = por %p100, %p101
      %s104 = sadd.s32 %s103, 1
      %p107 = scmp.eq.s32.totalorder %s13, 1
      %p108 = scmp.ne.s32.totalorder %s103, %s105
      %p109 = scmp.eq.s32.totalorder %s13, 0
      %p110 = por %p108, %p109
      %p111 = scmp.ne.s32.totalorder %s103, %s105
      %p112 = scmp.eq.s32.totalorder %s18, 1
      %p113 = por %p111, %p112
      %p114 = scmp.ne.s32.totalorder %s105, %s106
      %p115 = scmp.eq.s32.totalorder %s18, 0
      %p116 = por %p114, %p115
      %p117 = scmp.ne.s32.totalorder %s105, %s106
      %p118 = scmp.eq.s32.totalorder %s19, 1
      %p119 = por %p117, %p118
      %p121 = scmp.ne.s32.totalorder %s106, %s120
      %p122 = scmp.eq.s32.totalorder %s19, 0
      %p123 = por %p121, %p122
      %s124 = ssub.s32 %s20, %s32
      %p125 = scmp.eq.s32.totalorder %s124, 0
      %s127 = sadd.s32 %s126, 1
      %s128 = scalar_select %p125, %s126, %s127
      %p131 = pneg %p125
      %p132 = scmp.eq.s32.totalorder %s13, 1
      %p133 = por %p131, %p132
      %p134 = scmp.ne.s32.totalorder %s126, %s129
      %p135 = scmp.eq.s32.totalorder %s13, 0
      %p136 = por %p134, %p135
      %p137 = scmp.ne.s32.totalorder %s126, %s129
      %p138 = scmp.eq.s32.totalorder %s18, 1
      %p139 = por %p137, %p138
      %p140 = scmp.ne.s32.totalorder %s129, %s130
      %p141 = scmp.eq.s32.totalorder %s18, 0
      %p142 = por %p140, %p141
      %p143 = scmp.ne.s32.totalorder %s129, %s130
      %p144 = scmp.eq.s32.totalorder %s19, 1
      %p145 = por %p143, %p144
      %p147 = scmp.ne.s32.totalorder %s130, %s146
      %p148 = scmp.eq.s32.totalorder %s19, 0
      %p149 = por %p147, %p148
      %p150 = scmp.le.s32.totalorder 1, %s13
      %p151 = scmp.lt.s32.totalorder %s13, 3
      %p152 = pnand %p150, %p151
      %p153 = pneg %p152
      // Predicated region
      $region9: #{shufflenet_v2_add_gcn_forward.3} parent=5 // pred_check
        _
      $region10: #{shufflenet_v2_add_gcn_forward.3} parent=5 // pred_check_branch
        %155 = sbr.rel (%p152) target = $region12
      $region11: #{shufflenet_v2_add_gcn_forward.3} parent=5 // pred_region
        %s156 = ssub.s32 %s13, 1
        // Predicated region
        $region13: #{shufflenet_v2_add_gcn_forward.3} parent=11 // pred_check
          %p157 = pneg %p74
        $region14: #{shufflenet_v2_add_gcn_forward.3} parent=11 // pred_check_branch
          %159 = sbr.rel (%p157) target = $region16
        $region15: #{shufflenet_v2_add_gcn_forward.3} parent=11 // pred_region
          _
        $region16: #{shufflenet_v2_add_gcn_forward.3} parent=11 // pred_fallthru
          _
        // Predicated region
        $region17: #{shufflenet_v2_add_gcn_forward.3} parent=11 // pred_check
          %p160 = pneg %p95
        $region18: #{shufflenet_v2_add_gcn_forward.3} parent=11 // pred_check_branch
          %162 = sbr.rel (%p160) target = $region20
        $region19: #{shufflenet_v2_add_gcn_forward.3} parent=11 // pred_region
          _
        $region20: #{shufflenet_v2_add_gcn_forward.3} parent=11 // pred_fallthru
          _
        // Predicated region
        $region21: #{shufflenet_v2_add_gcn_forward.3} parent=11 // pred_check
          %p163 = pneg %p116
        $region22: #{shufflenet_v2_add_gcn_forward.3} parent=11 // pred_check_branch
          %165 = sbr.rel (%p163) target = $region24
        $region23: #{shufflenet_v2_add_gcn_forward.3} parent=11 // pred_region
          _
        $region24: #{shufflenet_v2_add_gcn_forward.3} parent=11 // pred_fallthru
          _
      $region12: #{shufflenet_v2_add_gcn_forward.3} parent=5 // pred_fallthru
        _
      %p166 = scmp.lt.s32.totalorder %s13, 2
      // Predicated region
      $region25: #{shufflenet_v2_add_gcn_forward.3} parent=5 // pred_check
        %p167 = pneg %p166
      $region26: #{shufflenet_v2_add_gcn_forward.3} parent=5 // pred_check_branch
        %169 = sbr.rel (%p167) target = $region28
      $region27: #{shufflenet_v2_add_gcn_forward.3} parent=5 // pred_region
        // Predicated region
        $region29: #{shufflenet_v2_add_gcn_forward.3} parent=27 // pred_check
          %p170 = pneg %p47
        $region30: #{shufflenet_v2_add_gcn_forward.3} parent=27 // pred_check_branch
          %172 = sbr.rel (%p170) target = $region32
        $region31: #{shufflenet_v2_add_gcn_forward.3} parent=27 // pred_region
          %s173 = smul.u32 2, %s21
          %p174 = scmp.lt.s32.totalorder %s20, 1
          %s175 = scalar_select %p174, %s20, 1
          %p176 = scmp.lt.s32.totalorder %s173, 1
          %s177 = scalar_select %p176, %s173, 1
          %s178 = smul.addr %s175, 2
          %s179 = sadd.s32 %s177, %s178
          %s180 = smul.addr %s179, 2
          %s181 = scalar_lea.vmem %s0, %s180
          %s182 = smul.u32 2, %s21
        $region32: #{shufflenet_v2_add_gcn_forward.3} parent=27 // pred_fallthru
          _
      $region28: #{shufflenet_v2_add_gcn_forward.3} parent=5 // pred_fallthru
        _
      %p183 = scmp.le.s32.totalorder 1, %s13
      %p184 = scmp.lt.s32.totalorder %s13, 3
      %p185 = pnand %p183, %p184
      %p186 = pneg %p185
      // Predicated region
      $region33: #{shufflenet_v2_add_gcn_forward.3} parent=5 // pred_check
        _
      $region34: #{shufflenet_v2_add_gcn_forward.3} parent=5 // pred_check_branch
        %188 = sbr.rel (%p185) target = $region36
      $region35: #{shufflenet_v2_add_gcn_forward.3} parent=5 // pred_region
        %s189 = ssub.s32 %s13, 1
        %s190 = smul.u32 2, %s23
        %p191 = scmp.lt.s32.totalorder %s22, 1
        %s192 = scalar_select %p191, %s22, 1
        %p193 = scmp.lt.s32.totalorder %s190, 1
        %s194 = scalar_select %p193, %s190, 1
        %s195 = smul.addr %s192, 2
        %s196 = sadd.s32 %s194, %s195
        %s197 = smul.addr %s196, 2
        %s198 = scalar_lea.vmem %s0, %s197
        %p199 = pneg %p53
        %p200 = pneg %p50
        %p201 = pneg %p74
        %p202 = pneg %p71
        %p203 = pneg %p95
        %p204 = pneg %p92
        %p205 = pneg %p116
        %p206 = pneg %p113
        %p207 = pneg %p142
        %p208 = pneg %p139
        %s209 = sand.u32 %s129, 1
        %s210 = scalar_lea.sflag [#allocation4], %s209
        %s211 = sand.u32 %s129, 1
        %s212 = scalar_lea.vmem [#allocation3], %s211
        %s213 = smul.u32 2, %s23
        %p214 = scmp.lt.s32.totalorder %s22, 1
        %s215 = scalar_select %p214, %s22, 1
        %p216 = scmp.lt.s32.totalorder %s213, 1
        %s217 = scalar_select %p216, %s213, 1
        %s218 = smul.addr %s215, 2
        %s219 = sadd.s32 %s217, %s218
        %s220 = smul.addr %s219, 2
        %s221 = scalar_lea.vmem %s0, %s220
        %s222 = smul.u32 2, %s23
        %p224 = scmp.eq.s32.totalorder %s23, 0
        // Predicated region
        $region37: #{shufflenet_v2_add_gcn_forward.3} parent=35 // pred_check
          %p225 = pneg %p224
        $region38: #{shufflenet_v2_add_gcn_forward.3} parent=35 // pred_check_branch
          %227 = sbr.rel (%p225) target = $region40
        $region39: #{shufflenet_v2_add_gcn_forward.3} parent=35 // pred_region
          %vm228 = vcmask 7168
          %229 = vst.msk [vmem:[#allocation2] sm:$0xff] %vm228, 0.0
          %230 = vst.msk [vmem:[#allocation2 + $0x8] sm:$0xff] %vm228, 0.0
          %231 = vst.msk [vmem:[#allocation2 + $0x10] sm:$0xff] %vm228, 0.0
          %232 = vst.msk [vmem:[#allocation2 + $0x18] sm:$0xff] %vm228, 0.0
          %233 = vst.msk [vmem:[#allocation2 + $0x20] sm:$0xff] %vm228, 0.0
          %234 = vst.msk [vmem:[#allocation2 + $0x28] sm:$0xff] %vm228, 0.0
          %235 = vst.msk [vmem:[#allocation2 + $0x30] sm:$0xff] %vm228, 0.0
          %236 = vst.msk [vmem:[#allocation2 + $0x38] sm:$0xff] %vm228, 0.0
          %237 = vst.msk [vmem:[#allocation2 + $0x40] sm:$0xff] %vm228, 0.0
          %238 = vst.msk [vmem:[#allocation2 + $0x48] sm:$0xff] %vm228, 0.0
          %239 = vst.msk [vmem:[#allocation2 + $0x50] sm:$0xff] %vm228, 0.0
          %240 = vst.msk [vmem:[#allocation2 + $0x58] sm:$0xff] %vm228, 0.0
          %241 = vst.msk [vmem:[#allocation2 + $0x60] sm:$0xff] %vm228, 0.0
          %242 = vst.msk [vmem:[#allocation2 + $0x68] sm:$0xff] %vm228, 0.0
          %243 = vst.msk [vmem:[#allocation2 + $0x70] sm:$0xff] %vm228, 0.0
          %244 = vst.msk [vmem:[#allocation2 + $0x78] sm:$0xff] %vm228, 0.0
        $region40: #{shufflenet_v2_add_gcn_forward.3} parent=35 // pred_fallthru
          _
        %v245 = vld [vmem:[%s221] sm:$0xf]
        %v246 = vld [vmem:[%s1] sm:$0xf]
        %v247 = vld [vmem:[%s1 + $0x4] sm:$0xf]
        %v248 = vld [vmem:[%s1 + $0x8] sm:$0xf]
        %v249 = vld [vmem:[%s1 + $0xc] sm:$0xf]
        %v250 = vld [vmem:[%s1 + $0x10] sm:$0xf]
        %v251 = vld [vmem:[%s1 + $0x14] sm:$0xf]
        %v252 = vld [vmem:[%s1 + $0x18] sm:$0xf]
        %v253 = vld [vmem:[%s1 + $0x1c] sm:$0xf]
        %v254 = vld [vmem:[%s1 + $0x20] sm:$0xf]
        %v255 = vld [vmem:[%s1 + $0x24] sm:$0xf]
        %v256 = vld [vmem:[%s1 + $0x28] sm:$0xf]
        %v257 = vld [vmem:[%s1 + $0x2c] sm:$0xf]
        %v258 = vld [vmem:[%s1 + $0x30] sm:$0xf]
        %v259 = vld [vmem:[%s1 + $0x34] sm:$0xf]
        %v260 = vld [vmem:[%s1 + $0x38] sm:$0xf]
        %v261 = vld [vmem:[%s1 + $0x3c] sm:$0xf]
        %v262 = vld [vmem:[%s2] sm:$0xff]
        %v263 = vld [vmem:[%s2 + $0x8] sm:$0xff]
        %v264 = vld [vmem:[%s2 + $0x10] sm:$0xff]
        %v265 = vld [vmem:[%s2 + $0x18] sm:$0xff]
        %v266 = vld [vmem:[%s2 + $0x20] sm:$0xff]
        %v267 = vld [vmem:[%s2 + $0x28] sm:$0xff]
        %v268 = vld [vmem:[%s2 + $0x30] sm:$0xff]
        %v269 = vld [vmem:[%s2 + $0x38] sm:$0xff]
        %v270 = vld [vmem:[%s2 + $0x40] sm:$0xff]
        %v271 = vld [vmem:[%s2 + $0x48] sm:$0xff]
        %v272 = vld [vmem:[%s2 + $0x50] sm:$0xff]
        %v273 = vld [vmem:[%s2 + $0x58] sm:$0xff]
        %v274 = vld [vmem:[%s2 + $0x60] sm:$0xff]
        %v275 = vld [vmem:[%s2 + $0x68] sm:$0xff]
        %v276 = vld [vmem:[%s2 + $0x70] sm:$0xff]
        %v277 = vld [vmem:[%s2 + $0x78] sm:$0xff]
        %279 = vset.pattern.permute.xlu0 0
        %280 = vperm.xlu0 %279, %v262
        %v281 = vpop.permute.xlu0 %280
        %284 = vset.pattern.permute.xlu0 0
        %285 = vperm.xlu0 %284, %v263
        %v286 = vpop.permute.xlu0 %285
        %289 = vset.pattern.permute.xlu0 0
        %290 = vperm.xlu0 %289, %v264
        %v291 = vpop.permute.xlu0 %290
        %294 = vset.pattern.permute.xlu0 0
        %295 = vperm.xlu0 %294, %v265
        %v296 = vpop.permute.xlu0 %295
        %299 = vset.pattern.permute.xlu0 0
        %300 = vperm.xlu0 %299, %v266
        %v301 = vpop.permute.xlu0 %300
        %304 = vset.pattern.permute.xlu0 0
        %305 = vperm.xlu0 %304, %v267
        %v306 = vpop.permute.xlu0 %305
        %309 = vset.pattern.permute.xlu0 0
        %310 = vperm.xlu0 %309, %v268
        %v311 = vpop.permute.xlu0 %310
        %314 = vset.pattern.permute.xlu0 0
        %315 = vperm.xlu0 %314, %v269
        %v316 = vpop.permute.xlu0 %315
        %319 = vset.pattern.permute.xlu0 0
        %320 = vperm.xlu0 %319, %v270
        %v321 = vpop.permute.xlu0 %320
        %324 = vset.pattern.permute.xlu0 0
        %325 = vperm.xlu0 %324, %v271
        %v326 = vpop.permute.xlu0 %325
        %329 = vset.pattern.permute.xlu0 0
        %330 = vperm.xlu0 %329, %v272
        %v331 = vpop.permute.xlu0 %330
        %334 = vset.pattern.permute.xlu0 0
        %335 = vperm.xlu0 %334, %v273
        %v336 = vpop.permute.xlu0 %335
        %339 = vset.pattern.permute.xlu0 0
        %340 = vperm.xlu0 %339, %v274
        %v341 = vpop.permute.xlu0 %340
        %344 = vset.pattern.permute.xlu0 0
        %345 = vperm.xlu0 %344, %v275
        %v346 = vpop.permute.xlu0 %345
        %349 = vset.pattern.permute.xlu0 0
        %350 = vperm.xlu0 %349, %v276
        %v351 = vpop.permute.xlu0 %350
        %354 = vset.pattern.permute.xlu0 0
        %355 = vperm.xlu0 %354, %v277
        %v356 = vpop.permute.xlu0 %355
        %v374 = vunpack.c.l.b16 %v246
        %v375 = vunpack.c.l.b16 %v247
        %v376 = vunpack.c.l.b16 %v248
        %v377 = vunpack.c.l.b16 %v249
        %v378 = vunpack.c.l.b16 %v250
        %v379 = vunpack.c.l.b16 %v251
        %v380 = vunpack.c.l.b16 %v252
        %v381 = vunpack.c.l.b16 %v253
        %v382 = vunpack.c.l.b16 %v254
        %v383 = vunpack.c.l.b16 %v255
        %v384 = vunpack.c.l.b16 %v256
        %v385 = vunpack.c.l.b16 %v257
        %v386 = vunpack.c.l.b16 %v258
        %v387 = vunpack.c.l.b16 %v259
        %v388 = vunpack.c.l.b16 %v260
        %v389 = vunpack.c.l.b16 %v261
        %v390 = vpack.c.b16 %v375, %v374
        %v391 = vpack.c.b16 %v377, %v376
        %v392 = vpack.c.b16 %v379, %v378
        %v393 = vpack.c.b16 %v381, %v380
        %v394 = vpack.c.b16 %v383, %v382
        %v395 = vpack.c.b16 %v385, %v384
        %v396 = vpack.c.b16 %v387, %v386
        %v397 = vpack.c.b16 %v389, %v388
        %399 = vst [vmem:[#allocation1] ss:$4 sm:$0xff] %v245
        %v400 = vld.sshfl [vmem:[#allocation1] sm:$0xff pattern:$0x73625140]
        %v401 = vld.sshfl [vmem:[#allocation1 + $0x8] sm:$0xff pattern:$0x73625140]
        %vm402 = vcmask 31744
        %v404 = vsel %vm402, %v390, 0
        %v407 = vsel %vm402, %v391, 0
        %v410 = vsel %vm402, %v392, 0
        %v413 = vsel %vm402, %v393, 0
        %v416 = vsel %vm402, %v394, 0
        %v419 = vsel %vm402, %v395, 0
        %v422 = vsel %vm402, %v396, 0
        %v425 = vsel %vm402, %v397, 0
        %vm427 = vcmask 1041408
        %v428 = vsel %vm427, %v400, 0
        %v430 = vsel %vm427, %v401, 0
        %432 = vmatpush.bf16.msra.mxu0 0
        %433 = vmatpush.bf16.msra.mxu0 0
        %434 = vmatpush.bf16.msra.mxu0 0
        %435 = vmatpush.bf16.msra.mxu0 0
        %436 = vmatpush.bf16.msra.mxu0 0
        %437 = vmatpush.bf16.msra.mxu0 0
        %438 = vmatpush.bf16.msra.mxu0 0
        %439 = vmatpush.bf16.msra.mxu0 %v428
        %440 = vmatmul.bf16.gmra.mxu0 %v404
        %v441 = vpop.f32.mrf.mxu0
        %v442 = vadd.f32 %v281, %v441
        %v443 = vpop.f32.mrf.mxu0
        %v444 = vadd.f32 %v286, %v443
        %445 = vmatmul.bf16.gmra.mxu0 %v407
        %v446 = vpop.f32.mrf.mxu0
        %v447 = vadd.f32 %v291, %v446
        %v448 = vpop.f32.mrf.mxu0
        %v449 = vadd.f32 %v296, %v448
        %450 = vmatmul.bf16.gmra.mxu0 %v410
        %v451 = vpop.f32.mrf.mxu0
        %v452 = vadd.f32 %v301, %v451
        %v453 = vpop.f32.mrf.mxu0
        %v454 = vadd.f32 %v306, %v453
        %455 = vmatmul.bf16.gmra.mxu0 %v413
        %v456 = vpop.f32.mrf.mxu0
        %v457 = vadd.f32 %v311, %v456
        %v458 = vpop.f32.mrf.mxu0
        %v459 = vadd.f32 %v316, %v458
        %460 = vmatmul.bf16.gmra.mxu0 %v416
        %v461 = vpop.f32.mrf.mxu0
        %v462 = vadd.f32 %v321, %v461
        %v463 = vpop.f32.mrf.mxu0
        %v464 = vadd.f32 %v326, %v463
        %465 = vmatmul.bf16.gmra.mxu0 %v419
        %v466 = vpop.f32.mrf.mxu0
        %v467 = vadd.f32 %v331, %v466
        %v468 = vpop.f32.mrf.mxu0
        %v469 = vadd.f32 %v336, %v468
        %470 = vmatmul.bf16.gmra.mxu0 %v422
        %v471 = vpop.f32.mrf.mxu0
        %v472 = vadd.f32 %v341, %v471
        %v473 = vpop.f32.mrf.mxu0
        %v474 = vadd.f32 %v346, %v473
        %475 = vmatmul.bf16.gmra.mxu0 %v425
        %v476 = vpop.f32.mrf.mxu0
        %v477 = vadd.f32 %v351, %v476
        %v478 = vpop.f32.mrf.mxu0
        %v479 = vadd.f32 %v356, %v478
        %480 = vdwg.mxu0
        %481 = vmatpush.bf16.msra.mxu0 0
        %482 = vmatpush.bf16.msra.mxu0 0
        %483 = vmatpush.bf16.msra.mxu0 0
        %484 = vmatpush.bf16.msra.mxu0 0
        %485 = vmatpush.bf16.msra.mxu0 0
        %486 = vmatpush.bf16.msra.mxu0 0
        %487 = vmatpush.bf16.msra.mxu0 0
        %488 = vmatpush.bf16.msra.mxu0 %v430
        %489 = vmatmul.bf16.gmra.mxu0 %v404
        %v490 = vpop.f32.mrf.mxu0
        %v491 = vadd.f32 %v281, %v490
        %v492 = vpop.f32.mrf.mxu0
        %v493 = vadd.f32 %v286, %v492
        %494 = vmatmul.bf16.gmra.mxu0 %v407
        %v495 = vpop.f32.mrf.mxu0
        %v496 = vadd.f32 %v291, %v495
        %v497 = vpop.f32.mrf.mxu0
        %v498 = vadd.f32 %v296, %v497
        %499 = vmatmul.bf16.gmra.mxu0 %v410
        %v500 = vpop.f32.mrf.mxu0
        %v501 = vadd.f32 %v301, %v500
        %v502 = vpop.f32.mrf.mxu0
        %v503 = vadd.f32 %v306, %v502
        %504 = vmatmul.bf16.gmra.mxu0 %v413
        %v505 = vpop.f32.mrf.mxu0
        %v506 = vadd.f32 %v311, %v505
        %v507 = vpop.f32.mrf.mxu0
        %v508 = vadd.f32 %v316, %v507
        %509 = vmatmul.bf16.gmra.mxu0 %v416
        %v510 = vpop.f32.mrf.mxu0
        %v511 = vadd.f32 %v321, %v510
        %v512 = vpop.f32.mrf.mxu0
        %v513 = vadd.f32 %v326, %v512
        %514 = vmatmul.bf16.gmra.mxu0 %v419
        %v515 = vpop.f32.mrf.mxu0
        %v516 = vadd.f32 %v331, %v515
        %v517 = vpop.f32.mrf.mxu0
        %v518 = vadd.f32 %v336, %v517
        %519 = vmatmul.bf16.gmra.mxu0 %v422
        %v520 = vpop.f32.mrf.mxu0
        %v521 = vadd.f32 %v341, %v520
        %v522 = vpop.f32.mrf.mxu0
        %v523 = vadd.f32 %v346, %v522
        %524 = vmatmul.bf16.gmra.mxu0 %v425
        %v525 = vpop.f32.mrf.mxu0
        %v526 = vadd.f32 %v351, %v525
        %v527 = vpop.f32.mrf.mxu0
        %v528 = vadd.f32 %v356, %v527
        %529 = vdwg.mxu0
        %v530 = vmax.f32 %v442, 0.0
        %v531 = vmax.f32 %v491, 0.0
        %v532 = vmax.f32 %v444, 0.0
        %v533 = vmax.f32 %v493, 0.0
        %v534 = vmax.f32 %v447, 0.0
        %v535 = vmax.f32 %v496, 0.0
        %v536 = vmax.f32 %v449, 0.0
        %v537 = vmax.f32 %v498, 0.0
        %v538 = vmax.f32 %v452, 0.0
        %v539 = vmax.f32 %v501, 0.0
        %v540 = vmax.f32 %v454, 0.0
        %v541 = vmax.f32 %v503, 0.0
        %v542 = vmax.f32 %v457, 0.0
        %v543 = vmax.f32 %v506, 0.0
        %v544 = vmax.f32 %v459, 0.0
        %v545 = vmax.f32 %v508, 0.0
        %v546 = vmax.f32 %v462, 0.0
        %v547 = vmax.f32 %v511, 0.0
        %v548 = vmax.f32 %v464, 0.0
        %v549 = vmax.f32 %v513, 0.0
        %v550 = vmax.f32 %v467, 0.0
        %v551 = vmax.f32 %v516, 0.0
        %v552 = vmax.f32 %v469, 0.0
        %v553 = vmax.f32 %v518, 0.0
        %v554 = vmax.f32 %v472, 0.0
        %v555 = vmax.f32 %v521, 0.0
        %v556 = vmax.f32 %v474, 0.0
        %v557 = vmax.f32 %v523, 0.0
        %v558 = vmax.f32 %v477, 0.0
        %v559 = vmax.f32 %v526, 0.0
        %v560 = vmax.f32 %v479, 0.0
        %v561 = vmax.f32 %v528, 0.0
        %v562 = vld [vmem:[#allocation2] sm:$0xff]
        %v563 = vld [vmem:[#allocation2 + $0x8] sm:$0xff]
        %v564 = vld [vmem:[#allocation2 + $0x10] sm:$0xff]
        %v565 = vld [vmem:[#allocation2 + $0x18] sm:$0xff]
        %v566 = vld [vmem:[#allocation2 + $0x20] sm:$0xff]
        %v567 = vld [vmem:[#allocation2 + $0x28] sm:$0xff]
        %v568 = vld [vmem:[#allocation2 + $0x30] sm:$0xff]
        %v569 = vld [vmem:[#allocation2 + $0x38] sm:$0xff]
        %v570 = vld [vmem:[#allocation2 + $0x40] sm:$0xff]
        %v571 = vld [vmem:[#allocation2 + $0x48] sm:$0xff]
        %v572 = vld [vmem:[#allocation2 + $0x50] sm:$0xff]
        %v573 = vld [vmem:[#allocation2 + $0x58] sm:$0xff]
        %v574 = vld [vmem:[#allocation2 + $0x60] sm:$0xff]
        %v575 = vld [vmem:[#allocation2 + $0x68] sm:$0xff]
        %v576 = vld [vmem:[#allocation2 + $0x70] sm:$0xff]
        %v577 = vld [vmem:[#allocation2 + $0x78] sm:$0xff]
        %v578 = vadd.f32 %v530, %v531
        %579 = vadd.xlane.f32.xlu0 %v578
        %v580 = vpop.xlane.xlu0 %579
        %v581 = vadd.f32 %v532, %v533
        %582 = vadd.xlane.f32.xlu0 %v581
        %v583 = vpop.xlane.xlu0 %582
        %v584 = vadd.f32 %v534, %v535
        %585 = vadd.xlane.f32.xlu0 %v584
        %v586 = vpop.xlane.xlu0 %585
        %v587 = vadd.f32 %v536, %v537
        %588 = vadd.xlane.f32.xlu0 %v587
        %v589 = vpop.xlane.xlu0 %588
        %v590 = vadd.f32 %v538, %v539
        %591 = vadd.xlane.f32.xlu0 %v590
        %v592 = vpop.xlane.xlu0 %591
        %v593 = vadd.f32 %v540, %v541
        %594 = vadd.xlane.f32.xlu0 %v593
        %v595 = vpop.xlane.xlu0 %594
        %v596 = vadd.f32 %v542, %v543
        %597 = vadd.xlane.f32.xlu0 %v596
        %v598 = vpop.xlane.xlu0 %597
        %v599 = vadd.f32 %v544, %v545
        %600 = vadd.xlane.f32.xlu0 %v599
        %v601 = vpop.xlane.xlu0 %600
        %v602 = vadd.f32 %v546, %v547
        %603 = vadd.xlane.f32.xlu0 %v602
        %v604 = vpop.xlane.xlu0 %603
        %v605 = vadd.f32 %v548, %v549
        %606 = vadd.xlane.f32.xlu0 %v605
        %v607 = vpop.xlane.xlu0 %606
        %v608 = vadd.f32 %v550, %v551
        %609 = vadd.xlane.f32.xlu0 %v608
        %v610 = vpop.xlane.xlu0 %609
        %v611 = vadd.f32 %v552, %v553
        %612 = vadd.xlane.f32.xlu0 %v611
        %v613 = vpop.xlane.xlu0 %612
        %v614 = vadd.f32 %v554, %v555
        %615 = vadd.xlane.f32.xlu0 %v614
        %v616 = vpop.xlane.xlu0 %615
        %v617 = vadd.f32 %v556, %v557
        %618 = vadd.xlane.f32.xlu0 %v617
        %v619 = vpop.xlane.xlu0 %618
        %v620 = vadd.f32 %v558, %v559
        %621 = vadd.xlane.f32.xlu0 %v620
        %v622 = vpop.xlane.xlu0 %621
        %v623 = vadd.f32 %v560, %v561
        %624 = vadd.xlane.f32.xlu0 %v623
        %v625 = vpop.xlane.xlu0 %624
        %v626 = vadd.f32 %v562, %v580
        %v627 = vadd.f32 %v563, %v583
        %v628 = vadd.f32 %v564, %v586
        %v629 = vadd.f32 %v565, %v589
        %v630 = vadd.f32 %v566, %v592
        %v631 = vadd.f32 %v567, %v595
        %v632 = vadd.f32 %v568, %v598
        %v633 = vadd.f32 %v569, %v601
        %v634 = vadd.f32 %v570, %v604
        %v635 = vadd.f32 %v571, %v607
        %v636 = vadd.f32 %v572, %v610
        %v637 = vadd.f32 %v573, %v613
        %v638 = vadd.f32 %v574, %v616
        %v639 = vadd.f32 %v575, %v619
        %v640 = vadd.f32 %v576, %v622
        %v641 = vadd.f32 %v577, %v625
        %vm642 = vcmask 7168
        %643 = vst.msk [vmem:[#allocation2] sm:$0xff] %vm642, %v626
        %644 = vst.msk [vmem:[#allocation2 + $0x8] sm:$0xff] %vm642, %v627
        %645 = vst.msk [vmem:[#allocation2 + $0x10] sm:$0xff] %vm642, %v628
        %646 = vst.msk [vmem:[#allocation2 + $0x18] sm:$0xff] %vm642, %v629
        %647 = vst.msk [vmem:[#allocation2 + $0x20] sm:$0xff] %vm642, %v630
        %648 = vst.msk [vmem:[#allocation2 + $0x28] sm:$0xff] %vm642, %v631
        %649 = vst.msk [vmem:[#allocation2 + $0x30] sm:$0xff] %vm642, %v632
        %650 = vst.msk [vmem:[#allocation2 + $0x38] sm:$0xff] %vm642, %v633
        %651 = vst.msk [vmem:[#allocation2 + $0x40] sm:$0xff] %vm642, %v634
        %652 = vst.msk [vmem:[#allocation2 + $0x48] sm:$0xff] %vm642, %v635
        %653 = vst.msk [vmem:[#allocation2 + $0x50] sm:$0xff] %vm642, %v636
        %654 = vst.msk [vmem:[#allocation2 + $0x58] sm:$0xff] %vm642, %v637
        %655 = vst.msk [vmem:[#allocation2 + $0x60] sm:$0xff] %vm642, %v638
        %656 = vst.msk [vmem:[#allocation2 + $0x68] sm:$0xff] %vm642, %v639
        %657 = vst.msk [vmem:[#allocation2 + $0x70] sm:$0xff] %vm642, %v640
        %658 = vst.msk [vmem:[#allocation2 + $0x78] sm:$0xff] %vm642, %v641
        // Predicated region
        $region41: #{shufflenet_v2_add_gcn_forward.3} parent=35 // pred_check
          %p659 = pneg %p224
        $region42: #{shufflenet_v2_add_gcn_forward.3} parent=35 // pred_check_branch
          %661 = sbr.rel (%p659) target = $region44
        $region43: #{shufflenet_v2_add_gcn_forward.3} parent=35 // pred_region
          %v662 = vld [vmem:[#allocation2] sm:$0xff]
          %v663 = vld [vmem:[#allocation2 + $0x8] sm:$0xff]
          %v664 = vld [vmem:[#allocation2 + $0x10] sm:$0xff]
          %v665 = vld [vmem:[#allocation2 + $0x18] sm:$0xff]
          %v666 = vld [vmem:[#allocation2 + $0x20] sm:$0xff]
          %v667 = vld [vmem:[#allocation2 + $0x28] sm:$0xff]
          %v668 = vld [vmem:[#allocation2 + $0x30] sm:$0xff]
          %v669 = vld [vmem:[#allocation2 + $0x38] sm:$0xff]
          %v670 = vld [vmem:[#allocation2 + $0x40] sm:$0xff]
          %v671 = vld [vmem:[#allocation2 + $0x48] sm:$0xff]
          %v672 = vld [vmem:[#allocation2 + $0x50] sm:$0xff]
          %v673 = vld [vmem:[#allocation2 + $0x58] sm:$0xff]
          %v674 = vld [vmem:[#allocation2 + $0x60] sm:$0xff]
          %v675 = vld [vmem:[#allocation2 + $0x68] sm:$0xff]
          %v676 = vld [vmem:[#allocation2 + $0x70] sm:$0xff]
          %v677 = vld [vmem:[#allocation2 + $0x78] sm:$0xff]
          %v678 = vmul.f32 %v662, 0.00390625
          %v679 = vmul.f32 %v663, 0.00390625
          %v680 = vmul.f32 %v664, 0.00390625
          %v681 = vmul.f32 %v665, 0.00390625
          %v682 = vmul.f32 %v666, 0.00390625
          %v683 = vmul.f32 %v667, 0.00390625
          %v684 = vmul.f32 %v668, 0.00390625
          %v685 = vmul.f32 %v669, 0.00390625
          %v686 = vmul.f32 %v670, 0.00390625
          %v687 = vmul.f32 %v671, 0.00390625
          %v688 = vmul.f32 %v672, 0.00390625
          %v689 = vmul.f32 %v673, 0.00390625
          %v690 = vmul.f32 %v674, 0.00390625
          %v691 = vmul.f32 %v675, 0.00390625
          %v692 = vmul.f32 %v676, 0.00390625
          %v693 = vmul.f32 %v677, 0.00390625
          %v694 = vld [vmem:[%s3] sm:$0xff]
          %v695 = vld [vmem:[%s3 + $0x8] sm:$0xff]
          %v696 = vld [vmem:[%s3 + $0x10] sm:$0xff]
          %v697 = vld [vmem:[%s3 + $0x18] sm:$0xff]
          %v698 = vld [vmem:[%s3 + $0x20] sm:$0xff]
          %v699 = vld [vmem:[%s3 + $0x28] sm:$0xff]
          %v700 = vld [vmem:[%s3 + $0x30] sm:$0xff]
          %v701 = vld [vmem:[%s3 + $0x38] sm:$0xff]
          %v702 = vld [vmem:[%s3 + $0x40] sm:$0xff]
          %v703 = vld [vmem:[%s3 + $0x48] sm:$0xff]
          %v704 = vld [vmem:[%s3 + $0x50] sm:$0xff]
          %v705 = vld [vmem:[%s3 + $0x58] sm:$0xff]
          %v706 = vld [vmem:[%s3 + $0x60] sm:$0xff]
          %v707 = vld [vmem:[%s3 + $0x68] sm:$0xff]
          %v708 = vld [vmem:[%s3 + $0x70] sm:$0xff]
          %v709 = vld [vmem:[%s3 + $0x78] sm:$0xff]
          %711 = vset.pattern.permute.xlu0 0
          %712 = vperm.xlu0 %711, %v678
          %v713 = vpop.permute.xlu0 %712
          %716 = vset.pattern.permute.xlu0 0
          %717 = vperm.xlu0 %716, %v679
          %v718 = vpop.permute.xlu0 %717
          %721 = vset.pattern.permute.xlu0 0
          %722 = vperm.xlu0 %721, %v680
          %v723 = vpop.permute.xlu0 %722
          %726 = vset.pattern.permute.xlu0 0
          %727 = vperm.xlu0 %726, %v681
          %v728 = vpop.permute.xlu0 %727
          %731 = vset.pattern.permute.xlu0 0
          %732 = vperm.xlu0 %731, %v682
          %v733 = vpop.permute.xlu0 %732
          %736 = vset.pattern.permute.xlu0 0
          %737 = vperm.xlu0 %736, %v683
          %v738 = vpop.permute.xlu0 %737
          %741 = vset.pattern.permute.xlu0 0
          %742 = vperm.xlu0 %741, %v684
          %v743 = vpop.permute.xlu0 %742
          %746 = vset.pattern.permute.xlu0 0
          %747 = vperm.xlu0 %746, %v685
          %v748 = vpop.permute.xlu0 %747
          %751 = vset.pattern.permute.xlu0 0
          %752 = vperm.xlu0 %751, %v686
          %v753 = vpop.permute.xlu0 %752
          %756 = vset.pattern.permute.xlu0 0
          %757 = vperm.xlu0 %756, %v687
          %v758 = vpop.permute.xlu0 %757
          %761 = vset.pattern.permute.xlu0 0
          %762 = vperm.xlu0 %761, %v688
          %v763 = vpop.permute.xlu0 %762
          %766 = vset.pattern.permute.xlu0 0
          %767 = vperm.xlu0 %766, %v689
          %v768 = vpop.permute.xlu0 %767
          %771 = vset.pattern.permute.xlu0 0
          %772 = vperm.xlu0 %771, %v690
          %v773 = vpop.permute.xlu0 %772
          %776 = vset.pattern.permute.xlu0 0
          %777 = vperm.xlu0 %776, %v691
          %v778 = vpop.permute.xlu0 %777
          %781 = vset.pattern.permute.xlu0 0
          %782 = vperm.xlu0 %781, %v692
          %v783 = vpop.permute.xlu0 %782
          %786 = vset.pattern.permute.xlu0 0
          %787 = vperm.xlu0 %786, %v693
          %v788 = vpop.permute.xlu0 %787
          %v790 = vmul.f32 %v713, %v694
          %v791 = vmul.f32 %v718, %v695
          %v792 = vmul.f32 %v723, %v696
          %v793 = vmul.f32 %v728, %v697
          %v794 = vmul.f32 %v733, %v698
          %v795 = vmul.f32 %v738, %v699
          %v796 = vmul.f32 %v743, %v700
          %v797 = vmul.f32 %v748, %v701
          %v798 = vmul.f32 %v753, %v702
          %v799 = vmul.f32 %v758, %v703
          %v800 = vmul.f32 %v763, %v704
          %v801 = vmul.f32 %v768, %v705
          %v802 = vmul.f32 %v773, %v706
          %v803 = vmul.f32 %v778, %v707
          %v804 = vmul.f32 %v783, %v708
          %v805 = vmul.f32 %v788, %v709
          %v806 = vadd.f32 %v790, %v791
          %v807 = vadd.f32 %v806, %v792
          %v808 = vadd.f32 %v807, %v793
          %v809 = vadd.f32 %v808, %v794
          %v810 = vadd.f32 %v809, %v795
          %v811 = vadd.f32 %v810, %v796
          %v812 = vadd.f32 %v811, %v797
          %v813 = vadd.f32 %v812, %v798
          %v814 = vadd.f32 %v813, %v799
          %v815 = vadd.f32 %v814, %v800
          %v816 = vadd.f32 %v815, %v801
          %v817 = vadd.f32 %v816, %v802
          %v818 = vadd.f32 %v817, %v803
          %v819 = vadd.f32 %v818, %v804
          %v820 = vadd.f32 %v819, %v805
          %v821 = vrot.slane %v820, 4
          %v822 = vadd.f32 %v820, %v821
          %v823 = vrot.slane %v822, 2
          %v824 = vadd.f32 %v822, %v823
          %v825 = vrot.slane %v824, 1
          %v826 = vadd.f32 %v824, %v825
          %v827 = vxor.u32 %v826, 2147483648
          %v828 = vmul.f32 %v827, 1.442695
          %v829 = vpow.pop %v828
          %v830 = vadd.f32 %v829, 1.0
          %v831 = vrcp.pop %v830
          %v832 = vmul.f32 %v830, %v831
          %v833 = vsub.f32 1.0, %v832
          %v834 = vmul.f32 %v831, %v833
          %v835 = vadd.f32 %v831, %v834
          %vm836 = vweird.f32 %v830
          %vm837 = vweird.f32 %v831
          %vm838 = vmor %vm836, %vm837
          %v839 = vsel %vm838, %v831, %v835
          %v840 = vand.u32 2147483647, %v830
          %vm841 = vcmp.eq.f32.partialorder %v840, 8.507059e+37
          %v842 = vand.u32 %v830, 2147483648
          %v843 = vor.u32 1.1754944e-38, %v842
          %v844 = vsel %vm841, %v843, %v839
          %v845 = vmul.f32 1.0, %v844
          %846 = vst [vmem:[%s212] sm:$0x1] %v845
        $region44: #{shufflenet_v2_add_gcn_forward.3} parent=35 // pred_fallthru
          _
        %s847 = sand.u32 %s129, 1
        %s848 = scalar_lea.sflag [#allocation4], %s847
        %s849 = sand.u32 %s129, 1
        %s850 = scalar_lea.vmem [#allocation3], %s849
        // Predicated region
        $region45: #{shufflenet_v2_add_gcn_forward.3} parent=35 // pred_check
          %p851 = pneg %p139
        $region46: #{shufflenet_v2_add_gcn_forward.3} parent=35 // pred_check_branch
          %853 = sbr.rel (%p851) target = $region48
        $region47: #{shufflenet_v2_add_gcn_forward.3} parent=35 // pred_region
          %855 = vsyncadd %s848, 0
          %s856 = scalar_lea.hbm %s4, %s22
          %s858 = sshll.u32 %s850, 4
          %s859 = int_to_ptr.vmem [resolvable:$true] %s858
          %s860 = sshll.u32 %s856, 4
          %s861 = int_to_ptr.hbm [resolvable:$true] %s860
          %863 = dma.vmem_to_hbm [thread:$0]  %s859, 16, %s861, %s848
        $region48: #{shufflenet_v2_add_gcn_forward.3} parent=35 // pred_fallthru
          _
      $region36: #{shufflenet_v2_add_gcn_forward.3} parent=5 // pred_fallthru
        _
      %p864 = scmp.le.s32.totalorder 2, %s13
      // Predicated region
      $region49: #{shufflenet_v2_add_gcn_forward.3} parent=5 // pred_check
        %p865 = pneg %p864
      $region50: #{shufflenet_v2_add_gcn_forward.3} parent=5 // pred_check_branch
        %867 = sbr.rel (%p865) target = $region52
      $region51: #{shufflenet_v2_add_gcn_forward.3} parent=5 // pred_region
        %s868 = ssub.s32 %s13, 2
        // Predicated region
        $region53: #{shufflenet_v2_add_gcn_forward.3} parent=51 // pred_check
          %p869 = pneg %p145
        $region54: #{shufflenet_v2_add_gcn_forward.3} parent=51 // pred_check_branch
          %871 = sbr.rel (%p869) target = $region56
        $region55: #{shufflenet_v2_add_gcn_forward.3} parent=51 // pred_region
          %s872 = sand.u32 %s130, 1
          %s873 = scalar_lea.sflag [#allocation4], %s872
          %s874 = sand.u32 %s130, 1
          %s875 = scalar_lea.vmem [#allocation3], %s874
          %877 = dma.done %s873, 16
        $region56: #{shufflenet_v2_add_gcn_forward.3} parent=51 // pred_fallthru
          _
      $region52: #{shufflenet_v2_add_gcn_forward.3} parent=5 // pred_fallthru
        _
    $region6: #{shufflenet_v2_add_gcn_forward.3} parent=1 // loop_footer
      %s17 = sadd.s32 1, %s13
    $region7: #{shufflenet_v2_add_gcn_forward.3} parent=1 // loop_footer_branch
      %12 = sbr.rel target = $region3
    $region8: #{shufflenet_v2_add_gcn_forward.3} parent=1 // loop_exit
      _
    %878 = vsyncpa [#allocation4], 1
    %s879 = scalar_lea.sflag [#allocation4], 1
    %880 = vsyncpa %s879, 1

</llo_original>
